<compile_context>
chip_gen: v7x
topology: tpu7x:2x2x1
jax: 0.10.0
libtpu: 0.0.40
codegen_flags: <defaults>
</compile_context>

<pallas_src>
import functools
import math

import jax
import jax.numpy as jnp
from jax import lax
from jax.experimental import pallas as pl
from jax.experimental.pallas import tpu as pltpu


# ----------------------------------------------------------------------------
# Fused linear kernel: out = act(x @ w + b), tiled over (M, N, K)
# ----------------------------------------------------------------------------
def _linear_kernel(x_ref, w_ref, b_ref, o_ref, acc_ref, *, activation):
    @pl.when(pl.program_id(2) == 0)
    def _():
        acc_ref[...] = jnp.zeros_like(acc_ref)

    acc_ref[...] += jnp.dot(
        x_ref[...], w_ref[...], preferred_element_type=jnp.float32
    )

    @pl.when(pl.program_id(2) == pl.num_programs(2) - 1)
    def _():
        y = acc_ref[...] + b_ref[...].astype(jnp.float32)
        if activation == "relu":
            y = jnp.maximum(y, 0.0)
        o_ref[...] = y.astype(o_ref.dtype)


def pallas_linear(x, w, b, activation=None, tm=256, tn=512, tk=512):
    """x: (M, K), w: (K, N)  [already (in, out) layout], b: (N,)."""
    M, K = x.shape
    K2, N = w.shape
    assert K == K2
    tm, tn, tk = min(tm, M), min(tn, N), min(tk, K)
    assert M % tm == 0 and N % tn == 0 and K % tk == 0
    b2 = b.reshape(1, N)

    kernel = functools.partial(_linear_kernel, activation=activation)
    return pl.pallas_call(
        kernel,
        out_shape=jax.ShapeDtypeStruct((M, N), x.dtype),
        grid_spec=pltpu.PrefetchScalarGridSpec(
            num_scalar_prefetch=0,
            grid=(M // tm, N // tn, K // tk),
            in_specs=[
                pl.BlockSpec((tm, tk), lambda i, j, k: (i, k)),
                pl.BlockSpec((tk, tn), lambda i, j, k: (k, j)),
                pl.BlockSpec((1, tn), lambda i, j, k: (0, j)),
            ],
            out_specs=pl.BlockSpec((tm, tn), lambda i, j, k: (i, j)),
            scratch_shapes=[pltpu.VMEM((tm, tn), jnp.float32)],
        ),
        compiler_params=pltpu.CompilerParams(
            dimension_semantics=("parallel", "parallel", "arbitrary"),
            vmem_limit_bytes=32 * 1024 * 1024,
        ),
    )(x, w, b2)


# ----------------------------------------------------------------------------
# Fused scaled-dot-product attention kernel (one (batch*head) slice per step)
# ----------------------------------------------------------------------------
def _attention_kernel(q_ref, k_ref, v_ref, o_ref, *, scale):
    q = q_ref[...].astype(jnp.float32)          # (1, S, Dh)
    k = k_ref[...].astype(jnp.float32)          # (1, S, Dh)
    v = v_ref[...].astype(jnp.float32)          # (1, S, Dh)

    s = jnp.einsum("bqd,bkd->bqk", q, k, preferred_element_type=jnp.float32) * scale
    s = s - jnp.max(s, axis=-1, keepdims=True)  # numerically stable softmax
    p = jnp.exp(s)
    denom = jnp.sum(p, axis=-1, keepdims=True)
    o = jnp.einsum("bqk,bkd->bqd", p, v, preferred_element_type=jnp.float32)
    o = o * pl.reciprocal(denom, approx=False)  # multiply, not divide
    o_ref[...] = o.astype(o_ref.dtype)


def pallas_attention(qh, kh, vh, scale):
    """qh/kh/vh: (B*H, S, Dh)."""
    BH, S, Dh = qh.shape
    kernel = functools.partial(_attention_kernel, scale=scale)
    return pl.pallas_call(
        kernel,
        out_shape=jax.ShapeDtypeStruct((BH, S, Dh), qh.dtype),
        grid_spec=pltpu.PrefetchScalarGridSpec(
            num_scalar_prefetch=0,
            grid=(BH,),
            in_specs=[
                pl.BlockSpec((1, S, Dh), lambda i: (i, 0, 0)),
                pl.BlockSpec((1, S, Dh), lambda i: (i, 0, 0)),
                pl.BlockSpec((1, S, Dh), lambda i: (i, 0, 0)),
            ],
            out_specs=pl.BlockSpec((1, S, Dh), lambda i: (i, 0, 0)),
        ),
        compiler_params=pltpu.CompilerParams(dimension_semantics=("parallel",)),
    )(qh, kh, vh)


# ----------------------------------------------------------------------------
# Fused residual-add + LayerNorm kernel
# ----------------------------------------------------------------------------
def _add_ln_kernel(x_ref, r_ref, g_ref, b_ref, o_ref, *, eps, inv_d):
    y = x_ref[...].astype(jnp.float32) + r_ref[...].astype(jnp.float32)
    mean = jnp.sum(y, axis=-1, keepdims=True) * inv_d
    yc = y - mean
    var = jnp.sum(yc * yc, axis=-1, keepdims=True) * inv_d
    inv = lax.rsqrt(var + eps)
    o_ref[...] = (yc * inv * g_ref[...] + b_ref[...]).astype(o_ref.dtype)


def pallas_add_layernorm(x, r, gamma, beta, eps=1e-5, tm=256):
    M, D = x.shape
    tm = min(tm, M)
    assert M % tm == 0
    g2 = gamma.reshape(1, D)
    b2 = beta.reshape(1, D)
    kernel = functools.partial(_add_ln_kernel, eps=eps, inv_d=1.0 / D)
    return pl.pallas_call(
        kernel,
        out_shape=jax.ShapeDtypeStruct((M, D), x.dtype),
        grid_spec=pltpu.PrefetchScalarGridSpec(
            num_scalar_prefetch=0,
            grid=(M // tm,),
            in_specs=[
                pl.BlockSpec((tm, D), lambda i: (i, 0)),
                pl.BlockSpec((tm, D), lambda i: (i, 0)),
                pl.BlockSpec((1, D), lambda i: (0, 0)),
                pl.BlockSpec((1, D), lambda i: (0, 0)),
            ],
            out_specs=pl.BlockSpec((tm, D), lambda i: (i, 0)),
        ),
        compiler_params=pltpu.CompilerParams(dimension_semantics=("parallel",)),
    )(x, r, g2, b2)


# ----------------------------------------------------------------------------
# TransformerEncoderLayer / TransformerEncoder forward (Pallas)
# ----------------------------------------------------------------------------
def transformer_encoder_layer_forward(x, p, nhead, pos=None):
    """x: (B, S, E). Weights stored in (in, out) layout."""
    B, S, E = x.shape
    Dh = E // nhead
    scale = 1.0 / math.sqrt(Dh)

    x_flat = x.reshape(B * S, E)
    qk_in = x_flat if pos is None else (x + pos).reshape(B * S, E)

    q = pallas_linear(qk_in, p["w_q"], p["b_q"])
    k = pallas_linear(qk_in, p["w_k"], p["b_k"])
    v = pallas_linear(x_flat, p["w_v"], p["b_v"])

    def to_heads(t):  # (B*S, E) -> (B*H, S, Dh)   wrapper-side layout plumbing
        return t.reshape(B, S, nhead, Dh).transpose(0, 2, 1, 3).reshape(B * nhead, S, Dh)

    o_heads = pallas_attention(to_heads(q), to_heads(k), to_heads(v), scale)
    o = o_heads.reshape(B, nhead, S, Dh).transpose(0, 2, 1, 3).reshape(B * S, E)

    attn_out = pallas_linear(o, p["w_o"], p["b_o"])
    h1 = pallas_add_layernorm(attn_out, x_flat, p["ln1_g"], p["ln1_b"])

    ff = pallas_linear(h1, p["w1"], p["b1"], activation="relu")
    ff2 = pallas_linear(ff, p["w2"], p["b2"])
    h2 = pallas_add_layernorm(ff2, h1, p["ln2_g"], p["ln2_b"])
    return h2.reshape(B, S, E)


def transformer_encoder_forward(x, layer_params, nhead, pos=None):
    out = x
    for p in layer_params:
        out = transformer_encoder_layer_forward(out, p, nhead, pos)
    return out


# ----------------------------------------------------------------------------
# Pure-JAX reference (mirrors the PyTorch module in eval mode)
# ----------------------------------------------------------------------------
def _layernorm_ref(x, g, b, eps=1e-5):
    mean = x.mean(-1, keepdims=True)
    var = ((x - mean) ** 2).mean(-1, keepdims=True)
    return (x - mean) / jnp.sqrt(var + eps) * g + b


def _mha_ref(q_in, k_in, v_in, p, nhead):
    B, S, E = q_in.shape
    Dh = E // nhead
    q = q_in @ p["w_q"] + p["b_q"]
    k = k_in @ p["w_k"] + p["b_k"]
    v = v_in @ p["w_v"] + p["b_v"]

    def heads(t):
        return t.reshape(B, S, nhead, Dh).transpose(0, 2, 1, 3)

    qh, kh, vh = heads(q), heads(k), heads(v)
    s = jnp.einsum("bhqd,bhkd->bhqk", qh, kh) / math.sqrt(Dh)
    a = jax.nn.softmax(s, axis=-1)
    o = jnp.einsum("bhqk,bhkd->bhqd", a, vh)
    o = o.transpose(0, 2, 1, 3).reshape(B, S, E)
    return o @ p["w_o"] + p["b_o"]


def _layer_ref(x, p, nhead, pos=None):
    qk = x if pos is None else x + pos
    attn = _mha_ref(qk, qk, x, p, nhead)
    h1 = _layernorm_ref(x + attn, p["ln1_g"], p["ln1_b"])
    ff = jnp.maximum(h1 @ p["w1"] + p["b1"], 0.0) @ p["w2"] + p["b2"]
    return _layernorm_ref(h1 + ff, p["ln2_g"], p["ln2_b"])


def _encoder_ref(x, layer_params, nhead, pos=None):
    out = x
    for p in layer_params:
        out = _layer_ref(out, p, nhead, pos)
    return out


# ----------------------------------------------------------------------------
# Parameter init + demo
# ----------------------------------------------------------------------------
def init_layer_params(key, d_model, dff):
    ks = jax.random.split(key, 10)

    def w(k, fan_in, fan_out):
        return jax.random.normal(k, (fan_in, fan_out), jnp.float32) / math.sqrt(fan_in)

    return dict(
        w_q=w(ks[0], d_model, d_model), b_q=0.01 * jax.random.normal(ks[1], (d_model,), jnp.float32),
        w_k=w(ks[2], d_model, d_model), b_k=jnp.zeros((d_model,), jnp.float32),
        w_v=w(ks[3], d_model, d_model), b_v=jnp.zeros((d_model,), jnp.float32),
        w_o=w(ks[4], d_model, d_model), b_o=0.01 * jax.random.normal(ks[5], (d_model,), jnp.float32),
        w1=w(ks[6], d_model, dff), b1=0.01 * jax.random.normal(ks[7], (dff,), jnp.float32),
        w2=w(ks[8], dff, d_model), b2=0.01 * jax.random.normal(ks[9], (d_model,), jnp.float32),
        ln1_g=jnp.ones((d_model,), jnp.float32), ln1_b=jnp.zeros((d_model,), jnp.float32),
        ln2_g=jnp.ones((d_model,), jnp.float32), ln2_b=jnp.zeros((d_model,), jnp.float32),
    )


if __name__ == "__main__":
    B, S, d_model, nhead, num_layers = 2, 8, 32, 4, 2
    dff = 2048  # TransformerEncoderLayer default dim_feedforward

    key = jax.random.PRNGKey(0)
    k_src, k_pos, *layer_keys = jax.random.split(key, 2 + num_layers)
    src = jax.random.normal(k_src, (B, S, d_model), jnp.float32)
    pos = 0.1 * jax.random.normal(k_pos, (B, S, d_model), jnp.float32)
    params = [init_layer_params(k, d_model, dff) for k in layer_keys]

    out = transformer_encoder_forward(src, params, nhead, pos=pos)
    out = jax.block_until_ready(out)

    ref = _encoder_ref(src, params, nhead, pos=pos)
    assert out.shape == ref.shape == (B, S, d_model)
    max_err = float(jnp.max(jnp.abs(out - ref)))
    assert jnp.allclose(out, ref, rtol=1e-4, atol=1e-4), f"max abs err = {max_err}"

    print("KERNEL_OK")
</pallas_src>

<mosaic_0001>
module attributes {stable_mosaic.version = 11 : i64} {
  func.func @_linear_kernel(%arg0: i32, %arg1: i32, %arg2: i32, %arg3: memref<16x32xf32, #tpu.memory_space<vmem>>, %arg4: memref<32x32xf32, #tpu.memory_space<vmem>>, %arg5: memref<1x32xf32, #tpu.memory_space<vmem>>, %arg6: memref<16x32xf32, #tpu.memory_space<vmem>>, %arg7: memref<16x32xf32, #tpu.memory_space<vmem>>) attributes {dimension_semantics = [#tpu.dimension_semantics<parallel>, #tpu.dimension_semantics<parallel>, #tpu.dimension_semantics<arbitrary>], iteration_bounds = array<i64: 1, 1, 1>, scalar_prefetch = 0 : i64, scratch_operands = 1 : i64, tpu.core_type = #tpu.core_type<tc>, window_params = [{transform_indices = @transform_0, window_bounds = array<i64: 16, 32>}, {transform_indices = @transform_1, window_bounds = array<i64: 32, 32>}, {transform_indices = @transform_2, window_bounds = array<i64: 1, 32>}, {transform_indices = @transform_3, window_bounds = array<i64: 16, 32>}]} {
    %c0_i32 = arith.constant 0 : i32
    %0 = arith.cmpi eq, %arg2, %c0_i32 : i32
    %1 = arith.extui %0 : i1 to i32
    %c0_i32_0 = arith.constant 0 : i32
    %2 = arith.cmpi ne, %1, %c0_i32_0 : i32
    scf.if %2 {
      %cst_10 = arith.constant 0.000000e+00 : f32
      %12 = vector.broadcast %cst_10 : f32 to vector<16x32xf32>
      %c0_11 = arith.constant 0 : index
      %c0_12 = arith.constant 0 : index
      %13 = vector.load %arg7[%c0_11, %c0_12] : memref<16x32xf32, #tpu.memory_space<vmem>>, vector<16x32xf32>
      tpu.vector_store %arg7[%c0_11, %c0_12], %12 {strides = array<i32>} : memref<16x32xf32, #tpu.memory_space<vmem>>, vector<16x32xf32>,
    } else {
    }
    %c0 = arith.constant 0 : index
    %c0_1 = arith.constant 0 : index
    %3 = vector.load %arg7[%c0, %c0_1] : memref<16x32xf32, #tpu.memory_space<vmem>>, vector<16x32xf32>
    %c0_2 = arith.constant 0 : index
    %c0_3 = arith.constant 0 : index
    %4 = vector.load %arg3[%c0_2, %c0_3] : memref<16x32xf32, #tpu.memory_space<vmem>>, vector<16x32xf32>
    %c0_4 = arith.constant 0 : index
    %c0_5 = arith.constant 0 : index
    %5 = vector.load %arg4[%c0_4, %c0_5] : memref<32x32xf32, #tpu.memory_space<vmem>>, vector<32x32xf32>
    %cst = arith.constant dense<0.000000e+00> : vector<16x32xf32>
    %6 = tpu.matmul %4, %5, %cst {dimension_numbers = #tpu.dot_dimension_numbers<[1], [0], [0], [1], [0, 0, 1, 1], [], []>} : vector<16x32xf32>, vector<32x32xf32>, vector<16x32xf32> -> vector<16x32xf32>
    %7 = arith.addf %3, %6 : vector<16x32xf32>
    %c0_6 = arith.constant 0 : index
    %c0_7 = arith.constant 0 : index
    %8 = vector.load %arg7[%c0_6, %c0_7] : memref<16x32xf32, #tpu.memory_space<vmem>>, vector<16x32xf32>
    tpu.vector_store %arg7[%c0_6, %c0_7], %7 {strides = array<i32>} : memref<16x32xf32, #tpu.memory_space<vmem>>, vector<16x32xf32>,
    %c0_i32_8 = arith.constant 0 : i32
    %9 = arith.cmpi eq, %arg2, %c0_i32_8 : i32
    %10 = arith.extui %9 : i1 to i32
    %c0_i32_9 = arith.constant 0 : i32
    %11 = arith.cmpi ne, %10, %c0_i32_9 : i32
    scf.if %11 {
      %c0_10 = arith.constant 0 : index
      %c0_11 = arith.constant 0 : index
      %12 = vector.load %arg7[%c0_10, %c0_11] : memref<16x32xf32, #tpu.memory_space<vmem>>, vector<16x32xf32>
      %c0_12 = arith.constant 0 : index
      %c0_13 = arith.constant 0 : index
      %13 = vector.load %arg5[%c0_12, %c0_13] : memref<1x32xf32, #tpu.memory_space<vmem>>, vector<1x32xf32>
      %14 = vector.broadcast %13 : vector<1x32xf32> to vector<16x32xf32>
      %15 = arith.addf %12, %14 : vector<16x32xf32>
      %c0_14 = arith.constant 0 : index
      %c0_15 = arith.constant 0 : index
      %16 = vector.load %arg6[%c0_14, %c0_15] : memref<16x32xf32, #tpu.memory_space<vmem>>, vector<16x32xf32>
      tpu.vector_store %arg6[%c0_14, %c0_15], %15 {strides = array<i32>} : memref<16x32xf32, #tpu.memory_space<vmem>>, vector<16x32xf32>,
    } else {
    }
    return
  }
  func.func @transform_0(%arg0: i32, %arg1: i32, %arg2: i32) -> (i32, i32) {
    %c0_i32 = arith.constant 0 : i32
    return %arg0, %arg2 : i32, i32
  }
  func.func @transform_1(%arg0: i32, %arg1: i32, %arg2: i32) -> (i32, i32) {
    %c0_i32 = arith.constant 0 : i32
    return %arg2, %arg1 : i32, i32
  }
  func.func @transform_2(%arg0: i32, %arg1: i32, %arg2: i32) -> (i32, i32) {
    %c0_i32 = arith.constant 0 : i32
    %c0_i32_0 = arith.constant 0 : i32
    return %c0_i32, %arg1 : i32, i32
  }
  func.func @transform_3(%arg0: i32, %arg1: i32, %arg2: i32) -> (i32, i32) {
    %c0_i32 = arith.constant 0 : i32
    return %arg0, %arg1 : i32, i32
  }
}

</mosaic_0001>

<llo_original>
// kernel: tpu_custom_call.1
$region0: #{tpu_custom_call.1}
  #allocation0 [shape = 'u32[]', space=smem, size = 0x4, offset = 0x4, fixed_abs, tag = 'smem constant byte address 0x4 - core index']
  #allocation1 [shape = 'u32[144,128]{1,0:T(1,128)}', space=vmem, size = 0x12000, scoped, tag = 'internal scratch']
  #allocation2 [shape = 'f32[16,32]{1,0:T(8,128)}', space=vmem, size = 0x2000, scoped, tag = 'scratch operand']
  %s0 = inlined_call_operand.hbm [shape: f32[16,32], index: 0, kind: input, shape index: {}]
  %s1 = inlined_call_operand.hbm [shape: f32[32,32], index: 1, kind: input, shape index: {}]
  %s2 = inlined_call_operand.vmem [shape: f32[1,32], index: 2, kind: input, shape index: {}]
  %s3 = inlined_call_operand.hbm [shape: f32[16,32], index: 3, kind: output, shape index: {}]
  %s4 = sld [smem:[#allocation0]]
  $region38: #{tpu_custom_call.1} parent=0
    _
  %s6 = ssub.s32 1, %s4
  %s7 = scalar_select 0, %s6, %s4
  $region1: #{tpu_custom_call.1} parent=0
    #allocation3 [shape = 'u8[8192]{0}', space=vmem, size = 0x2000, scoped, tag = 'input window, operand 0, single buffered']
    #allocation4 [shape = 's32[1]{0}', space=sflag, size = 0x4, scoped, tag = 'scoped memory for tpu_custom_call.1']
    #allocation5 [shape = 's32[1]{0}', space=sflag, size = 0x4, scoped, tag = 'scoped memory for tpu_custom_call.1']
    #allocation6 [shape = 'u8[16384]{0}', space=vmem, size = 0x4000, scoped, tag = 'input window, operand 1, single buffered']
    #allocation7 [shape = 's32[1]{0}', space=sflag, size = 0x4, scoped, tag = 'scoped memory for tpu_custom_call.1']
    #allocation8 [shape = 'u8[8192]{0}', space=vmem, size = 0x2000, scoped, tag = 'output window, operand 0, single buffered']
    %8 = vsyncpa [#allocation4], 0
    %9 = vsyncpa [#allocation7], 0
    %10 = vsyncpa [#allocation5], 0
    // Predicated region
    $region2: #{tpu_custom_call.1} parent=1 // pred_check
      _
    $region3: #{tpu_custom_call.1} parent=1 // pred_check_branch
      %12 = sbr.rel (0) target = $region5
    $region4: #{tpu_custom_call.1} parent=1 // pred_region
      %s14 = ssub.s32 256, 256
      %15 = vsyncadd [#allocation4], %s14
      %s16 = sshll.u32 [#allocation3], 4
      %s17 = int_to_ptr.vmem [resolvable:$true] %s16
      %22 = dma.hbm_to_vmem [thread:$0]  %s0, 256, %s17, [#allocation4], 128, 128, 8
    $region5: #{tpu_custom_call.1} parent=1 // pred_fallthru
      _
    // Predicated region
    $region6: #{tpu_custom_call.1} parent=1 // pred_check
      _
    $region7: #{tpu_custom_call.1} parent=1 // pred_check_branch
      %24 = sbr.rel (0) target = $region9
    $region8: #{tpu_custom_call.1} parent=1 // pred_region
      %s26 = ssub.s32 512, 512
      %27 = vsyncadd [#allocation7], %s26
      %s28 = sshll.u32 [#allocation6], 4
      %s29 = int_to_ptr.vmem [resolvable:$true] %s28
      %34 = dma.hbm_to_vmem [thread:$0]  %s1, 512, %s29, [#allocation7], 128, 128, 8
    $region9: #{tpu_custom_call.1} parent=1 // pred_fallthru
      _
    // Predicated region
    $region10: #{tpu_custom_call.1} parent=1 // pred_check
      _
    $region11: #{tpu_custom_call.1} parent=1 // pred_check_branch
      %36 = sbr.rel (0) target = $region13
    $region12: #{tpu_custom_call.1} parent=1 // pred_region
      _
    $region13: #{tpu_custom_call.1} parent=1 // pred_fallthru
      _
    // Predicated region
    $region14: #{tpu_custom_call.1} parent=1 // pred_check
      _
    $region15: #{tpu_custom_call.1} parent=1 // pred_check_branch
      %38 = sbr.rel (0) target = $region17
    $region16: #{tpu_custom_call.1} parent=1 // pred_region
      %39 = dma.done [#allocation4], 256
    $region17: #{tpu_custom_call.1} parent=1 // pred_fallthru
      _
    // Predicated region
    $region18: #{tpu_custom_call.1} parent=1 // pred_check
      _
    $region19: #{tpu_custom_call.1} parent=1 // pred_check_branch
      %41 = sbr.rel (0) target = $region21
    $region20: #{tpu_custom_call.1} parent=1 // pred_region
      %42 = dma.done [#allocation7], 512
    $region21: #{tpu_custom_call.1} parent=1 // pred_fallthru
      _
    %p43 = scmp.eq.s32.totalorder 0, 0
    // Predicated region
    $region22: #{tpu_custom_call.1} parent=1 // pred_check
      %p44 = pneg %p43
    $region23: #{tpu_custom_call.1} parent=1 // pred_check_branch
      %46 = sbr.rel (%p44) target = $region25
    $region24: #{tpu_custom_call.1} parent=1 // pred_region
      %vm47 = vcmask 261120
      %48 = vst.msk [vmem:[#allocation2] sm:$0xff] %vm47, 0.0
      %49 = vst.msk [vmem:[#allocation2 + $0x8] sm:$0xff] %vm47, 0.0
    $region25: #{tpu_custom_call.1} parent=1 // pred_fallthru
      _
    %v50 = vld [vmem:[#allocation2] sm:$0xff]
    %v51 = vld [vmem:[#allocation2 + $0x8] sm:$0xff]
    %v52 = vld [vmem:[#allocation3] sm:$0xff]
    %v53 = vld [vmem:[#allocation3 + $0x8] sm:$0xff]
    %v54 = vld [vmem:[#allocation6] sm:$0xff]
    %v55 = vld [vmem:[#allocation6 + $0x8] sm:$0xff]
    %v56 = vld [vmem:[#allocation6 + $0x10] sm:$0xff]
    %v57 = vld [vmem:[#allocation6 + $0x18] sm:$0xff]
    %vm58 = vcmask 261120
    %v60 = vsel %vm58, %v52, 0
    %v63 = vsel %vm58, %v53, 0
    %65 = vmatprep.subr.mxu0 0.0
    %66 = vmatpush1.msra.mxu0 %v54
    %67 = vmatprep.subr.mxu0 0.0
    %68 = vmatpush1.msra.mxu0 %v55
    %69 = vmatprep.subr.mxu0 0.0
    %70 = vmatpush1.msra.mxu0 %v56
    %71 = vmatprep.subr.mxu0 0.0
    %72 = vmatpush1.msra.mxu0 %v57
    %73 = vmatprep.subr.mxu0 0.0
    %74 = vmatpush1.msra.mxu0 0.0
    %75 = vmatprep.subr.mxu0 0.0
    %76 = vmatpush1.msra.mxu0 0.0
    %77 = vmatprep.subr.mxu0 0.0
    %78 = vmatpush1.msra.mxu0 0.0
    %79 = vmatprep.subr.mxu0 0.0
    %80 = vmatpush1.msra.mxu0 0.0
    %81 = vmatprep.subr.mxu0 0.0
    %82 = vmatpush1.msra.mxu0 0.0
    %83 = vmatprep.subr.mxu0 0.0
    %84 = vmatpush1.msra.mxu0 0.0
    %85 = vmatprep.subr.mxu0 0.0
    %86 = vmatpush1.msra.mxu0 0.0
    %87 = vmatprep.subr.mxu0 0.0
    %88 = vmatpush1.msra.mxu0 0.0
    %89 = vmatprep.subr.mxu0 0.0
    %90 = vmatpush1.msra.mxu0 0.0
    %91 = vmatprep.subr.mxu0 0.0
    %92 = vmatpush1.msra.mxu0 0.0
    %93 = vmatprep.subr.mxu0 0.0
    %94 = vmatpush1.msra.mxu0 0.0
    %95 = vmatprep.subr.mxu0 0.0
    %96 = vmatpush1.msra.mxu0 0.0
    %97 = vmatprep.subr.mxu0 0.0
    %98 = vmatpush1.msra.mxu0 0.0
    %99 = vmatprep.subr.mxu0 0.0
    %100 = vmatpush1.msra.mxu0 0.0
    %101 = vmatprep.subr.mxu0 0.0
    %102 = vmatpush1.msra.mxu0 0.0
    %103 = vmatprep.subr.mxu0 0.0
    %104 = vmatpush1.msra.mxu0 0.0
    %105 = vmatprep.subr.mxu0 0.0
    %106 = vmatpush1.msra.mxu0 0.0
    %107 = vmatprep.subr.mxu0 0.0
    %108 = vmatpush1.msra.mxu0 0.0
    %109 = vmatprep.subr.mxu0 0.0
    %110 = vmatpush1.msra.mxu0 0.0
    %111 = vmatprep.subr.mxu0 0.0
    %112 = vmatpush1.msra.mxu0 0.0
    %113 = vmatprep.subr.mxu0 0.0
    %114 = vmatpush1.msra.mxu0 0.0
    %115 = vmatprep.subr.mxu0 0.0
    %116 = vmatpush1.msra.mxu0 0.0
    %117 = vmatprep.subr.mxu0 0.0
    %118 = vmatpush1.msra.mxu0 0.0
    %119 = vmatprep.subr.mxu0 0.0
    %120 = vmatpush1.msra.mxu0 0.0
    %121 = vmatprep.subr.mxu0 0.0
    %122 = vmatpush1.msra.mxu0 0.0
    %123 = vmatprep.subr.mxu0 0.0
    %124 = vmatpush1.msra.mxu0 0.0
    %125 = vmatprep.subr.mxu0 0.0
    %126 = vmatpush1.msra.mxu0 0.0
    %127 = vmatprep.subr.mxu0 0.0
    %128 = vmatpush1.msra.mxu0 0.0
    %129 = vmatprep.mubr.f32.mxu0 0.0
    %130 = vmatmul.mubr.f32.gmra.mrb[0].mxu0 %v60
    %v131 = vpop.f32.mrb[0].mxu0
    %v132 = vadd.f32 0.0, %v131
    %v133 = vpop.f32.mrb[0].mxu0
    %134 = vmatprep.mubr.f32.mxu0 0.0
    %135 = vmatmul.mubr.f32.gmra.mrb[0].mxu0 %v63
    %v136 = vpop.f32.mrb[0].mxu0
    %v137 = vadd.f32 0.0, %v136
    %v138 = vpop.f32.mrb[0].mxu0
    %139 = vdwg.mxu0
    %v140 = vadd.f32 %v50, %v132
    %v141 = vadd.f32 %v51, %v137
    %142 = vst.msk [vmem:[#allocation2] sm:$0xff] %vm58, %v140
    %143 = vst.msk [vmem:[#allocation2 + $0x8] sm:$0xff] %vm58, %v141
    // Predicated region
    $region26: #{tpu_custom_call.1} parent=1 // pred_check
      %p144 = pneg %p43
    $region27: #{tpu_custom_call.1} parent=1 // pred_check_branch
      %146 = sbr.rel (%p144) target = $region29
    $region28: #{tpu_custom_call.1} parent=1 // pred_region
      %v147 = vld [vmem:[#allocation2] sm:$0xff]
      %v148 = vld [vmem:[#allocation2 + $0x8] sm:$0xff]
      %v149 = vld [vmem:[%s2] sm:$0x1]
      %v151 = vlaneseq
      %v152 = vshrl.u32 %v151, 7
      %v153 = vsub.s32 0, %v152
      %v154 = vrot.slane %v149, %v153
      %v156 = vadd.f32 %v147, %v154
      %v157 = vadd.f32 %v148, %v154
      %158 = vst.msk [vmem:[#allocation8] sm:$0xff] %vm58, %v156
      %159 = vst.msk [vmem:[#allocation8 + $0x8] sm:$0xff] %vm58, %v157
    $region29: #{tpu_custom_call.1} parent=1 // pred_fallthru
      _
    // Predicated region
    $region30: #{tpu_custom_call.1} parent=1 // pred_check
      _
    $region31: #{tpu_custom_call.1} parent=1 // pred_check_branch
      %161 = sbr.rel (0) target = $region33
    $region32: #{tpu_custom_call.1} parent=1 // pred_region
      %s163 = ssub.s32 256, 256
      %164 = vsyncadd [#allocation5], %s163
      %s165 = sshll.u32 [#allocation8], 4
      %s166 = int_to_ptr.vmem [resolvable:$true] %s165
      %171 = dma.vmem_to_hbm [thread:$0]  %s166, 256, %s3, [#allocation5], 128, 128, 8
    $region33: #{tpu_custom_call.1} parent=1 // pred_fallthru
      _
    // Predicated region
    $region34: #{tpu_custom_call.1} parent=1 // pred_check
      _
    $region35: #{tpu_custom_call.1} parent=1 // pred_check_branch
      %173 = sbr.rel (0) target = $region37
    $region36: #{tpu_custom_call.1} parent=1 // pred_region
      %174 = dma.done [#allocation5], 256
    $region37: #{tpu_custom_call.1} parent=1 // pred_fallthru
      _
    %175 = vsyncpa [#allocation4], 1
    %176 = vsyncpa [#allocation7], 1
    %177 = vsyncpa [#allocation5], 1

</llo_original>
